<compile_context>
chip_gen: v5e
topology: v5e:2x2
jax: 0.10.0
libtpu: 0.0.40
codegen_flags: <defaults>
</compile_context>

<pallas_src>
import functools
import numpy as np
import jax
import jax.numpy as jnp
from jax.experimental import pallas as pl
from jax.experimental.pallas import tpu as pltpu


# ---------------------------------------------------------------------------
# Stand-ins for the un-provided ScaleNN helpers (deterministic, in-script).
# ---------------------------------------------------------------------------
_R_EPS = 1e-6  # safety floor used by the r_safety_set stand-in
_LANES = 128


def compute_shape_parameters(R, R_min, R_min2, scaler):
    # TODO(synk): ScaleNN.compute_shape_parameters source not provided; use a
    # simple deterministic ellipsoid parameterization (a >= b, eccentricity e).
    a = float(R) * float(scaler)
    b = float(R_min) * float(scaler)
    e = float(np.sqrt(max(1.0 - (b / a) ** 2, 0.0)))
    return a, b, e


# ---------------------------------------------------------------------------
# Pallas kernel
# ---------------------------------------------------------------------------
def _analytic_kernel(scal_ref, r_ref, u_ref, o_ref, *, a, c1, c2, c20,
                     k_c20, k_pm_b, k_int, mu):
    # scal_ref: SMEM (2,) f32 -> [r_external, k_external]
    # r_ref:    VMEM (TR, 128) radius tile
    # u_ref:    VMEM (TR, 128) u (=sin(lat)) tile
    # o_ref:    VMEM (TR, 128) output tile
    r_ext = scal_ref[0]
    k_ext = scal_ref[1]

    r = r_ref[...]
    u = u_ref[...]

    # r_safety_set: clamp r away from zero and take a safe inverse.
    # TODO(synk): ScaleNN.r_safety_set source not provided; eps-clamp used.
    r_cap = jnp.maximum(r, _R_EPS)
    # Exact reciprocal: HBM-bound kernel, so the divide is free and we avoid
    # tripling an approx error through r_inv^3.
    r_inv_cap = 1.0 / r_cap

    poly = u * u * c1 - c2

    # u_external_full = -(mu/r + mu*a^2*C20 * poly / r^3)
    #   k_c20 = mu * a^2 * C20  (folded at trace time)
    u_external_full = -(mu * r_inv_cap
                        + k_c20 * (r_inv_cap * r_inv_cap * r_inv_cap) * poly)

    # u_boundary = -(mu/a + mu/a * poly * C20) = -(mu/a) * (1 + C20*poly)
    #   k_pm_b = mu / a
    u_boundary = -k_pm_b * (1.0 + c20 * poly)

    # u_internal = (mu/a^3) * r_cap^2 + 2*u_boundary
    #   k_int = mu / a^3
    u_internal = k_int * (r_cap * r_cap) + 2.0 * u_boundary

    u_analytic = jnp.where(r < a, u_internal, u_external_full)

    # H(r, r_external, k_external) gate (kept as tanh to match the reference).
    h_external = 0.5 + 0.5 * jnp.tanh(k_ext * (r - r_ext))

    o_ref[...] = u_analytic * h_external


# ---------------------------------------------------------------------------
# Jitted forward: gather/pad/reshape + pallas_call + epilogue in one XLA graph
# ---------------------------------------------------------------------------
def _forward(inputs, scalars, *, a, c1, c2, c20, mu, tile_rows):
    inputs = inputs.astype(jnp.float32)
    n, f = inputs.shape
    assert f >= 4, "inputs must have at least 4 feature columns"

    # Lane-dense restructure: pull the two used columns, pad, reshape to
    # (rows, 128) so every f32 vreg lane carries real data.  Under jit the
    # gather + pad + reshape fuse into a single pass before the kernel.
    r_col = inputs[:, 0]
    u_col = inputs[:, 3]

    rows_needed = -(-n // _LANES)                 # ceil(n / 128)
    if rows_needed <= tile_rows:
        tr = rows_needed                          # single full-array block
        rows = rows_needed
    else:
        tr = tile_rows                            # multiple of 8 -> tileable
        rows = -(-rows_needed // tr) * tr
    pad = rows * _LANES - n
    if pad:
        # pad r with 1.0 (benign radius) and u with 0.0; padded outputs are
        # sliced away below.
        r_col = jnp.pad(r_col, (0, pad), constant_values=1.0)
        u_col = jnp.pad(u_col, (0, pad), constant_values=0.0)
    r2 = r_col.reshape(rows, _LANES)
    u2 = u_col.reshape(rows, _LANES)

    kernel = functools.partial(
        _analytic_kernel,
        a=a, c1=c1, c2=c2, c20=c20,
        k_c20=mu * a * a * c20,
        k_pm_b=mu / a,
        k_int=mu / (a ** 3),
        mu=mu,
    )

    out2 = pl.pallas_call(
        kernel,
        out_shape=jax.ShapeDtypeStruct((rows, _LANES), jnp.float32),
        grid=(rows // tr,),
        in_specs=[
            pl.BlockSpec(memory_space=pltpu.SMEM),              # scalars
            pl.BlockSpec((tr, _LANES), lambda i: (i, 0)),       # r tile
            pl.BlockSpec((tr, _LANES), lambda i: (i, 0)),       # u tile
        ],
        out_specs=pl.BlockSpec((tr, _LANES), lambda i: (i, 0)),
        input_output_aliases={1: 0},   # reuse r2's HBM buffer for the output
        compiler_params=pltpu.CompilerParams(
            dimension_semantics=("parallel",),
            vmem_limit_bytes=32 * 1024 * 1024,
        ),
    )(scalars, r2, u2)

    return out2.reshape(rows * _LANES)[:n].reshape(n, 1)


# ---------------------------------------------------------------------------
# Wrapper ("module")
# ---------------------------------------------------------------------------
class AnalyticModelLayerPallas:
    def __init__(self, R, R_min, mu, C20, scaler, tile_rows=4096):
        self.C20 = float(C20)
        self.scaler = scaler
        self.c1 = float(np.sqrt(15.0 / 4.0) * np.sqrt(3.0))
        self.c2 = float(np.sqrt(5.0 / 4.0))
        a, b, e = compute_shape_parameters(R, R_min, R_min, scaler)
        self.a = float(a)
        self.b = float(b)
        self.mu = float(mu)
        self.tile_rows = int(tile_rows)
        # trainable parameters, deterministic init (same as the torch module)
        # TODO(synk): gradients w.r.t. r_external/k_external require wrapping
        # the pallas_call in jax.custom_vjp; only the forward pass is here.
        self.r_external = jnp.zeros((1,), dtype=jnp.float32)
        self.k_external = 0.5 * jnp.ones((1,), dtype=jnp.float32)
        self._forward = jax.jit(functools.partial(
            _forward,
            a=self.a, c1=self.c1, c2=self.c2, c20=self.C20, mu=self.mu,
            tile_rows=self.tile_rows))

    def __call__(self, inputs):
        scalars = jnp.concatenate(
            [self.r_external, self.k_external]).astype(jnp.float32)
        return self._forward(jnp.asarray(inputs, jnp.float32), scalars)


# ---------------------------------------------------------------------------
# Pure-JAX reference (mirrors the torch forward) for a correctness check.
# ---------------------------------------------------------------------------
def _reference(layer, inputs):
    r = inputs[:, 0:1]
    u = inputs[:, 3:4]
    r_cap = jnp.maximum(r, _R_EPS)
    r_inv_cap = 1.0 / r_cap
    u_pm_external = layer.mu * r_inv_cap
    u_c20 = (
        (layer.a * r_inv_cap) ** 2
        * u_pm_external
        * (u ** 2 * layer.c1 - layer.c2)
        * layer.C20
    )
    u_external_full = -(u_pm_external + u_c20)
    u_external_pm_boundary = layer.mu / layer.a
    u_external_c20_boundary = (
        u_external_pm_boundary * (u ** 2 * layer.c1 - layer.c2) * layer.C20
    )
    u_boundary = -(u_external_pm_boundary + u_external_c20_boundary)
    u_internal = layer.mu * (r_cap ** 2 / layer.a ** 3) + 2 * u_boundary
    u_analytic = jnp.where(r < layer.a, u_internal, u_external_full)
    h_external = 0.5 + 0.5 * jnp.tanh(layer.k_external * (r - layer.r_external))
    return u_analytic * h_external


def _make_inputs(key, n, f=4):
    # column 0: radius in (0.3, 2.0); column 3: u = sin(lat) in (-1, 1)
    k0, k1 = jax.random.split(key)
    x = jax.random.uniform(k0, (n, f), dtype=jnp.float32, minval=0.3, maxval=2.0)
    x = x.at[:, 3].set(
        jax.random.uniform(k1, (n,), dtype=jnp.float32, minval=-1.0, maxval=1.0)
    )
    return x


if __name__ == "__main__":
    key = jax.random.PRNGKey(0)
    k_small, k_tiled = jax.random.split(key)

    # Small case: single full-array block path (and padding to 128 lanes).
    layer = AnalyticModelLayerPallas(R=1.0, R_min=0.5, mu=1.0, C20=-1.0e-3,
                                     scaler=1.0)
    x_small = _make_inputs(k_small, 8)
    out_small = jax.block_until_ready(layer(x_small))
    ref_small = _reference(layer, x_small)
    np.testing.assert_allclose(np.asarray(out_small), np.asarray(ref_small),
                               rtol=3e-5, atol=1e-6)

    # Tiled case: small tile_rows to exercise the multi-step pipelined grid
    # (3 x (256,128) tiles), tail padding, and input/output aliasing under
    # pipelining.  The default tile_rows=4096 follows the same code path.
    layer_tiled = AnalyticModelLayerPallas(R=1.0, R_min=0.5, mu=1.0,
                                           C20=-1.0e-3, scaler=1.0,
                                           tile_rows=256)
    x_tiled = _make_inputs(k_tiled, 2 * 256 * _LANES + 37)
    out_tiled = jax.block_until_ready(layer_tiled(x_tiled))
    ref_tiled = _reference(layer_tiled, x_tiled)
    np.testing.assert_allclose(np.asarray(out_tiled), np.asarray(ref_tiled),
                               rtol=3e-5, atol=1e-6)

    print("KERNEL_OK")
</pallas_src>

<mosaic_0001>
module attributes {stable_mosaic.version = 11 : i64} {
  func.func @_analytic_kernel(%arg0: i32, %arg1: memref<2xf32, #tpu.memory_space<smem>>, %arg2: memref<1x128xf32, #tpu.memory_space<vmem>>, %arg3: memref<1x128xf32, #tpu.memory_space<vmem>>, %arg4: memref<1x128xf32, #tpu.memory_space<vmem>>) attributes {dimension_semantics = [#tpu.dimension_semantics<parallel>], iteration_bounds = array<i64: 1>, scalar_prefetch = 0 : i64, scratch_operands = 0 : i64, tpu.core_type = #tpu.core_type<tc>, window_params = [{transform_indices = @transform_0, window_bounds = array<i64: 2>}, {transform_indices = @transform_1, window_bounds = array<i64: 1, 128>}, {transform_indices = @transform_2, window_bounds = array<i64: 1, 128>}, {transform_indices = @transform_3, window_bounds = array<i64: 1, 128>}]} {
    %c0 = arith.constant 0 : index
    %0 = memref.load %arg1[%c0] : memref<2xf32, #tpu.memory_space<smem>>
    %c1 = arith.constant 1 : index
    %1 = memref.load %arg1[%c1] : memref<2xf32, #tpu.memory_space<smem>>
    %c0_0 = arith.constant 0 : index
    %c0_1 = arith.constant 0 : index
    %2 = vector.load %arg2[%c0_0, %c0_1] : memref<1x128xf32, #tpu.memory_space<vmem>>, vector<1x128xf32>
    %c0_2 = arith.constant 0 : index
    %c0_3 = arith.constant 0 : index
    %3 = vector.load %arg3[%c0_2, %c0_3] : memref<1x128xf32, #tpu.memory_space<vmem>>, vector<1x128xf32>
    %cst = arith.constant 9.99999997E-7 : f32
    %4 = vector.broadcast %cst : f32 to vector<1x128xf32>
    %5 = arith.maximumf %2, %4 : vector<1x128xf32>
    %cst_4 = arith.constant 1.000000e+00 : f32
    %6 = vector.broadcast %cst_4 : f32 to vector<1x128xf32>
    %7 = arith.divf %6, %5 : vector<1x128xf32>
    %8 = arith.mulf %3, %3 : vector<1x128xf32>
    %cst_5 = arith.constant 3.3541019 : f32
    %9 = vector.broadcast %cst_5 : f32 to vector<1x128xf32>
    %10 = arith.mulf %8, %9 : vector<1x128xf32>
    %cst_6 = arith.constant 1.11803401 : f32
    %11 = vector.broadcast %cst_6 : f32 to vector<1x128xf32>
    %12 = arith.subf %10, %11 : vector<1x128xf32>
    %cst_7 = arith.constant 1.000000e+00 : f32
    %13 = vector.broadcast %cst_7 : f32 to vector<1x128xf32>
    %14 = arith.mulf %13, %7 : vector<1x128xf32>
    %15 = arith.mulf %7, %7 : vector<1x128xf32>
    %16 = arith.mulf %15, %7 : vector<1x128xf32>
    %cst_8 = arith.constant -1.000000e-03 : f32
    %17 = vector.broadcast %cst_8 : f32 to vector<1x128xf32>
    %18 = arith.mulf %17, %16 : vector<1x128xf32>
    %19 = arith.mulf %18, %12 : vector<1x128xf32>
    %20 = arith.addf %14, %19 : vector<1x128xf32>
    %cst_9 = arith.constant 0.000000e+00 : f32
    %21 = vector.broadcast %cst_9 : f32 to vector<1x128xf32>
    %22 = arith.subf %21, %20 : vector<1x128xf32>
    %cst_10 = arith.constant -1.000000e-03 : f32
    %23 = vector.broadcast %cst_10 : f32 to vector<1x128xf32>
    %24 = arith.mulf %23, %12 : vector<1x128xf32>
    %cst_11 = arith.constant 1.000000e+00 : f32
    %25 = vector.broadcast %cst_11 : f32 to vector<1x128xf32>
    %26 = arith.addf %25, %24 : vector<1x128xf32>
    %cst_12 = arith.constant -1.000000e+00 : f32
    %27 = vector.broadcast %cst_12 : f32 to vector<1x128xf32>
    %28 = arith.mulf %27, %26 : vector<1x128xf32>
    %29 = arith.mulf %5, %5 : vector<1x128xf32>
    %cst_13 = arith.constant 1.000000e+00 : f32
    %30 = vector.broadcast %cst_13 : f32 to vector<1x128xf32>
    %31 = arith.mulf %30, %29 : vector<1x128xf32>
    %cst_14 = arith.constant 2.000000e+00 : f32
    %32 = vector.broadcast %cst_14 : f32 to vector<1x128xf32>
    %33 = arith.mulf %32, %28 : vector<1x128xf32>
    %34 = arith.addf %31, %33 : vector<1x128xf32>
    %cst_15 = arith.constant 1.000000e+00 : f32
    %35 = vector.broadcast %cst_15 : f32 to vector<1x128xf32>
    %36 = arith.cmpf olt, %2, %35 : vector<1x128xf32>
    %37 = arith.select %36, %34, %22 : vector<1x128xi1>, vector<1x128xf32>
    %38 = vector.broadcast %0 : f32 to vector<1x128xf32>
    %39 = arith.subf %2, %38 : vector<1x128xf32>
    %40 = vector.broadcast %1 : f32 to vector<1x128xf32>
    %41 = arith.mulf %40, %39 : vector<1x128xf32>
    %42 = math.tanh %41 : vector<1x128xf32>
    %cst_16 = arith.constant 5.000000e-01 : f32
    %43 = vector.broadcast %cst_16 : f32 to vector<1x128xf32>
    %44 = arith.mulf %43, %42 : vector<1x128xf32>
    %cst_17 = arith.constant 5.000000e-01 : f32
    %45 = vector.broadcast %cst_17 : f32 to vector<1x128xf32>
    %46 = arith.addf %45, %44 : vector<1x128xf32>
    %47 = arith.mulf %37, %46 : vector<1x128xf32>
    %c0_18 = arith.constant 0 : index
    %c0_19 = arith.constant 0 : index
    %48 = vector.load %arg4[%c0_18, %c0_19] : memref<1x128xf32, #tpu.memory_space<vmem>>, vector<1x128xf32>
    tpu.vector_store %arg4[%c0_18, %c0_19], %47 {strides = array<i32>} : memref<1x128xf32, #tpu.memory_space<vmem>>, vector<1x128xf32>,
    return
  }
  func.func @transform_0(%arg0: i32) -> i32 {
    %c0_i32 = arith.constant 0 : i32
    %c0_i32_0 = arith.constant 0 : i32
    return %c0_i32 : i32
  }
  func.func @transform_1(%arg0: i32) -> (i32, i32) {
    %c0_i32 = arith.constant 0 : i32
    %c0_i32_0 = arith.constant 0 : i32
    return %arg0, %c0_i32 : i32, i32
  }
  func.func @transform_2(%arg0: i32) -> (i32, i32) {
    %c0_i32 = arith.constant 0 : i32
    %c0_i32_0 = arith.constant 0 : i32
    return %arg0, %c0_i32 : i32, i32
  }
  func.func @transform_3(%arg0: i32) -> (i32, i32) {
    %c0_i32 = arith.constant 0 : i32
    %c0_i32_0 = arith.constant 0 : i32
    return %arg0, %c0_i32 : i32, i32
  }
}

</mosaic_0001>

<llo_original>
// kernel: _forward.1
$region0: #{_forward.1}
  #allocation0 [shape = 'u32[]', space=smem, size = 0x4, offset = 0x4, fixed_abs, tag = 'smem constant byte address 0x4 - core index']
  #allocation1 [shape = 'u32[72,128]{1,0:T(1,128)}', space=vmem, size = 0x9000, scoped, tag = 'internal scratch']
  %s0 = inlined_call_operand.vmem [shape: f32[2], index: 0, kind: input, shape index: {}]
  %s1 = inlined_call_operand.vmem [shape: f32[1,128], index: 1, kind: input, shape index: {}, may-alias: {1,3}]
  %s2 = inlined_call_operand.vmem [shape: f32[1,128], index: 2, kind: input, shape index: {}]
  %s3 = inlined_call_operand.vmem [shape: f32[1,128], index: 3, kind: output, shape index: {}, may-alias: {1,3}]
  %s4 = sld [smem:[#allocation0]]
  $region26: #{_forward.1} parent=0
    _
  %s6 = ssub.s32 1, %s4
  %s7 = scalar_select 0, %s6, %s4
  $region1: #{_forward.1} parent=0
    #allocation2 [shape = 'u8[512]{0}', space=smem, size = 0x200, scoped, tag = 'input window, operand 0, single buffered']
    #allocation3 [shape = 's32[1]{0}', space=sflag, size = 0x4, scoped, tag = 'scoped memory for _forward.1']
    %8 = vsyncpa [#allocation3], 0
    // Predicated region
    $region2: #{_forward.1} parent=1 // pred_check
      _
    $region3: #{_forward.1} parent=1 // pred_check_branch
      %10 = sbr.rel (0) target = $region5
    $region4: #{_forward.1} parent=1 // pred_region
      %12 = vsyncadd [#allocation3], 0
      %s14 = sshll.u32 %s0, 4
      %s15 = int_to_ptr.vmem [resolvable:$true] %s14
      %17 = dma.vmem_to_smem %s15, 16, [#allocation2], [#allocation3]
    $region5: #{_forward.1} parent=1 // pred_fallthru
      _
    // Predicated region
    $region6: #{_forward.1} parent=1 // pred_check
      _
    $region7: #{_forward.1} parent=1 // pred_check_branch
      %19 = sbr.rel (0) target = $region9
    $region8: #{_forward.1} parent=1 // pred_region
      _
    $region9: #{_forward.1} parent=1 // pred_fallthru
      _
    // Predicated region
    $region10: #{_forward.1} parent=1 // pred_check
      _
    $region11: #{_forward.1} parent=1 // pred_check_branch
      %21 = sbr.rel (0) target = $region13
    $region12: #{_forward.1} parent=1 // pred_region
      _
    $region13: #{_forward.1} parent=1 // pred_fallthru
      _
    // Predicated region
    $region14: #{_forward.1} parent=1 // pred_check
      _
    $region15: #{_forward.1} parent=1 // pred_check_branch
      %23 = sbr.rel (0) target = $region17
    $region16: #{_forward.1} parent=1 // pred_region
      %25 = dma.done [#allocation3], 16
    $region17: #{_forward.1} parent=1 // pred_fallthru
      _
    %26 = sfence
    %s27 = sld [smem:[#allocation2]]
    %s28 = sld [smem:[#allocation2 + $0x1]]
    %v29 = vld [vmem:[%s1] sm:$0x1]
    %v30 = vld [vmem:[%s2] sm:$0x1]
    %v31 = vmax.f32 %v29, 1e-06
    %v32 = vrcp.pop %v31
    %v33 = vmul.f32 %v31, %v32
    %v34 = vsub.f32 1.0, %v33
    %v35 = vmul.f32 %v32, %v34
    %v36 = vadd.f32 %v32, %v35
    %vm37 = vweird.f32 %v31
    %vm38 = vweird.f32 %v32
    %vm39 = vmor %vm37, %vm38
    %v40 = vsel %vm39, %v32, %v36
    %v41 = vand.u32 2147483647, %v31
    %vm42 = vcmp.eq.f32.partialorder %v41, 8.507059e+37
    %v43 = vand.u32 %v31, 2147483648
    %v44 = vor.u32 1.1754944e-38, %v43
    %v45 = vsel %vm42, %v44, %v40
    %v46 = vmul.f32 1.0, %v45
    %v47 = vmul.f32 %v30, %v30
    %v48 = vmul.f32 %v47, 3.354102
    %v49 = vsub.f32 %v48, 1.118034
    %v50 = vmul.f32 %v46, %v46
    %v51 = vmul.f32 %v50, %v46
    %v52 = vmul.f32 %v51, -0.001
    %v53 = vmul.f32 %v52, %v49
    %v54 = vadd.f32 %v46, %v53
    %v55 = vsub.f32 0.0, %v54
    %v56 = vmul.f32 %v49, -0.001
    %v57 = vadd.f32 %v56, 1.0
    %v58 = vmul.f32 %v57, -1.0
    %v59 = vmul.f32 %v31, %v31
    %v60 = vmul.f32 %v58, 2.0
    %v61 = vadd.f32 %v59, %v60
    %vm62 = vcmp.lt.f32.partialorder %v29, 1.0
    %v63 = vsel %vm62, %v61, %v55
    %v64 = vstv %s27
    %v65 = vsub.f32 %v29, %v64
    %v66 = vstv %s28
    %v67 = vmul.f32 %v66, %v65
    %v68 = vtanh.pop %v67
    %v69 = vmul.f32 %v68, 0.5
    %v70 = vadd.f32 %v69, 0.5
    %v71 = vmul.f32 %v63, %v70
    %72 = vst [vmem:[%s3] sm:$0x1] %v71
    // Predicated region
    $region18: #{_forward.1} parent=1 // pred_check
      _
    $region19: #{_forward.1} parent=1 // pred_check_branch
      %74 = sbr.rel (0) target = $region21
    $region20: #{_forward.1} parent=1 // pred_region
      _
    $region21: #{_forward.1} parent=1 // pred_fallthru
      _
    // Predicated region
    $region22: #{_forward.1} parent=1 // pred_check
      _
    $region23: #{_forward.1} parent=1 // pred_check_branch
      %76 = sbr.rel (0) target = $region25
    $region24: #{_forward.1} parent=1 // pred_region
      _
    $region25: #{_forward.1} parent=1 // pred_fallthru
      _
    %77 = vsyncpa [#allocation3], 1

</llo_original>
